<compile_context>
chip_gen: v5e
topology: v5e:2x2
jax: 0.10.0
libtpu: 0.0.40
codegen_flags: <defaults>
</compile_context>

<pallas_src>
import math
from functools import partial

import jax
import jax.numpy as jnp
from jax import lax
from jax.experimental import pallas as pl
from jax.experimental.pallas import tpu as pltpu


# ----------------------------------------------------------------------------
# Fused kernel: per (batch, query-block, head)
#   q/k/v projection -> softmax attention -> per-head W_O slice -> accumulate
# ----------------------------------------------------------------------------
def mha_fused_kernel(xfull_ref, xq_ref, wq_ref, wkv_ref, wo_ref, o_ref, acc_ref,
                     *, scale, head_sz, compute_dtype):
    # xfull_ref: (1, dim, N)        full activation for this batch (channel-major)
    # xq_ref   : (1, dim, TQ)       query-block columns of the same activation
    # wq_ref   : (1, head_sz, dim)  per-head Q projection
    # wkv_ref  : (1, 2*head_sz, dim) per-head K and V projections (fused)
    # wo_ref   : (1, dim, head_sz)  per-head slice of W_O
    # o_ref    : (1, dim, TQ)       NCHW-layout output block
    # acc_ref  : (dim, TQ) f32      accumulator over heads (grid axis 2)
    hh = pl.program_id(2)
    cdt = compute_dtype

    x_full = xfull_ref[0].astype(cdt)                              # (dim, N)
    x_q = xq_ref[0].astype(cdt)                                    # (dim, TQ)

    # Projections (1x1 conv == channel matmul), f32 MXU accumulation.
    q = jnp.dot(wq_ref[0].astype(cdt), x_q,
                preferred_element_type=jnp.float32)                # (head_sz, TQ)
    kv = jnp.dot(wkv_ref[0].astype(cdt), x_full,
                 preferred_element_type=jnp.float32)               # (2*head_sz, N)
    k = kv[:head_sz]                                               # (head_sz, N)
    v = kv[head_sz:]                                               # (head_sz, N)

    # Fold the 1/sqrt(head_sz) scale into the small q tile (not the scores).
    q = q * scale

    # scores[n, nq] = k_n . q_nq  -> (N, TQ); lane dim = TQ (dense).
    s = lax.dot_general(k.astype(cdt), q.astype(cdt),
                        (((0,), (0,)), ((), ())),
                        preferred_element_type=jnp.float32)        # (N, TQ)

    # Numerically-stable softmax over keys (axis 0), f32; normalization deferred.
    m = jnp.max(s, axis=0, keepdims=True)                          # (1, TQ)
    p = jnp.exp(s - m)                                             # (N, TQ)
    l = jnp.sum(p, axis=0, keepdims=True)                          # (1, TQ)
    # l is tiny after deferral, so the exact reciprocal costs nothing.
    inv_l = pl.reciprocal(l, approx=False)                         # (1, TQ)

    # Unnormalized attention output, then fused per-head W_O projection.
    r = jnp.dot(v.astype(cdt), p.astype(cdt),
                preferred_element_type=jnp.float32)                # (head_sz, TQ)
    contrib = jnp.dot(wo_ref[0].astype(cdt), r.astype(cdt),
                      preferred_element_type=jnp.float32)          # (dim, TQ)
    contrib = contrib * inv_l                                      # normalize tiny tile

    @pl.when(hh == 0)
    def _():
        acc_ref[...] = jnp.zeros_like(acc_ref)

    acc_ref[...] += contrib

    @pl.when(hh == pl.num_programs(2) - 1)
    def _():
        o_ref[0] = acc_ref[...].astype(o_ref.dtype)


# ----------------------------------------------------------------------------
# Wrapper
# ----------------------------------------------------------------------------
def multi_head_attention(x, Wq, Wk, Wv, Wo, h, *, tq=None,
                         compute_dtype=jnp.bfloat16, vmem_limit_bytes=None):
    """x: NCHW [B, dim, H, W]; W{q,k,v}: [d_model, dim, 1, 1]; Wo: [dim, d_model, 1, 1]."""
    B, dim, Hs, Ws = x.shape
    d_model = Wq.shape[0]
    assert d_model % h == 0
    head_sz = d_model // h
    N = Hs * Ws
    scale = 1.0 / math.sqrt(head_sz)

    # Query-block size: multiple of 128 when possible; per-generation tunable
    # (v6e: 512-1024 with a raised vmem limit, v7x: ~256, v5e: <=256).
    if tq is None:
        tq = next((t for t in (512, 256, 128) if N % t == 0), N)
    assert N % tq == 0, "N must be divisible by the query tile size"

    # NCHW -> channel-major tokens (B, dim, N); no transpose needed.
    x_cn = x.reshape(B, dim, N)

    # Conv2d weight (out, in, 1, 1); out channel c = head*head_sz + s.
    wq_h = Wq[:, :, 0, 0].reshape(h, head_sz, dim)                   # (h, hs, dim)
    wk_h = Wk[:, :, 0, 0].reshape(h, head_sz, dim)
    wv_h = Wv[:, :, 0, 0].reshape(h, head_sz, dim)
    wkv_h = jnp.concatenate([wk_h, wv_h], axis=1)                    # (h, 2*hs, dim)
    # W_O: (dim, d_model) -> per-head slices (h, dim, head_sz).
    wo_h = jnp.transpose(Wo[:, :, 0, 0].reshape(dim, h, head_sz), (1, 0, 2))

    cp_kwargs = dict(dimension_semantics=("parallel", "parallel", "arbitrary"))
    if vmem_limit_bytes is not None:
        cp_kwargs["vmem_limit_bytes"] = vmem_limit_bytes

    grid = (B, N // tq, h)
    out = pl.pallas_call(
        partial(mha_fused_kernel, scale=scale, head_sz=head_sz,
                compute_dtype=compute_dtype),
        out_shape=jax.ShapeDtypeStruct((B, dim, N), x.dtype),
        grid=grid,
        in_specs=[
            # full activation: resident across (qi, hh) — re-DMA only per batch
            pl.BlockSpec((1, dim, N), lambda b, qi, hh: (b, 0, 0)),
            # query-block columns of the same activation
            pl.BlockSpec((1, dim, tq), lambda b, qi, hh: (b, 0, qi)),
            pl.BlockSpec((1, head_sz, dim), lambda b, qi, hh: (hh, 0, 0)),
            pl.BlockSpec((1, 2 * head_sz, dim), lambda b, qi, hh: (hh, 0, 0)),
            pl.BlockSpec((1, dim, head_sz), lambda b, qi, hh: (hh, 0, 0)),
        ],
        out_specs=pl.BlockSpec((1, dim, tq), lambda b, qi, hh: (b, 0, qi)),
        scratch_shapes=[pltpu.VMEM((dim, tq), jnp.float32)],
        compiler_params=pltpu.CompilerParams(**cp_kwargs),
    )(x_cn, x_cn, wq_h, wkv_h, wo_h)

    return out.reshape(B, dim, Hs, Ws)


# ----------------------------------------------------------------------------
# Pure-JAX reference (same math) for correctness checks.
# ----------------------------------------------------------------------------
def reference(x, Wq, Wk, Wv, Wo, h):
    B, dim, Hs, Ws = x.shape
    d_model = Wq.shape[0]
    head_sz = d_model // h
    N = Hs * Ws

    def conv1x1(x_nchw, w):  # w: (out, in, 1, 1)
        return jnp.einsum('bcn,oc->bon', x_nchw.reshape(B, x_nchw.shape[1], N),
                          w[:, :, 0, 0])

    q = conv1x1(x, Wq).reshape(B, h, head_sz, N).transpose(0, 1, 3, 2)
    k = conv1x1(x, Wk).reshape(B, h, head_sz, N).transpose(0, 1, 3, 2)
    v = conv1x1(x, Wv).reshape(B, h, head_sz, N).transpose(0, 1, 3, 2)
    s = jnp.einsum('bhqd,bhkd->bhqk', q, k) / math.sqrt(head_sz)
    p = jax.nn.softmax(s, axis=-1)
    r = jnp.einsum('bhqk,bhkd->bhqd', p, v)                      # (B,h,N,hs)
    r = r.transpose(0, 1, 3, 2).reshape(B, d_model, N)           # b (h s) n
    out = jnp.einsum('bcn,oc->bon', r, Wo[:, :, 0, 0])
    return out.reshape(B, dim, Hs, Ws)


if __name__ == "__main__":
    # Small shapes consistent with the module (dim=3 channels, square spatial).
    B, dim, Hs, Ws = 2, 3, 16, 16
    d_model, h = 32, 4

    key = jax.random.PRNGKey(0)
    kx, kq, kk, kv, ko = jax.random.split(key, 5)

    x = jax.random.normal(kx, (B, dim, Hs, Ws), dtype=jnp.float32)

    # Deterministic Conv2d-style (kaiming-uniform-ish) weight init, bias=False.
    def conv_w(k, out_c, in_c):
        bound = 1.0 / math.sqrt(in_c)
        return jax.random.uniform(k, (out_c, in_c, 1, 1), jnp.float32, -bound, bound)

    Wq = conv_w(kq, d_model, dim)
    Wk = conv_w(kk, d_model, dim)
    Wv = conv_w(kv, d_model, dim)
    Wo = conv_w(ko, dim, d_model)

    ref = reference(x, Wq, Wk, Wv, Wo, h)

    # f32 MXU path: tight check against the pure-JAX reference.
    out_f32 = jax.block_until_ready(
        multi_head_attention(x, Wq, Wk, Wv, Wo, h, compute_dtype=jnp.float32))
    assert out_f32.shape == (B, dim, Hs, Ws)
    assert jnp.allclose(out_f32, ref, atol=1e-4, rtol=1e-4), "f32 mismatch vs reference"

    # bf16 MXU path (default; f32 softmax + f32 accumulation): looser tolerance.
    out_bf16 = jax.block_until_ready(multi_head_attention(x, Wq, Wk, Wv, Wo, h))
    assert out_bf16.shape == (B, dim, Hs, Ws)
    assert jnp.allclose(out_bf16, ref, atol=1e-2, rtol=1e-2), "bf16 mismatch vs reference"

    print("KERNEL_OK")
</pallas_src>

<mosaic_0001>
module attributes {stable_mosaic.version = 11 : i64} {
  func.func @mha_fused_kernel(%arg0: i32, %arg1: i32, %arg2: i32, %arg3: memref<1x3x256xf32, #tpu.memory_space<vmem>>, %arg4: memref<1x3x256xf32, #tpu.memory_space<vmem>>, %arg5: memref<1x8x3xf32, #tpu.memory_space<vmem>>, %arg6: memref<1x16x3xf32, #tpu.memory_space<vmem>>, %arg7: memref<1x3x8xf32, #tpu.memory_space<vmem>>, %arg8: memref<1x3x256xf32, #tpu.memory_space<vmem>>, %arg9: memref<3x256xf32, #tpu.memory_space<vmem>>) attributes {dimension_semantics = [#tpu.dimension_semantics<parallel>, #tpu.dimension_semantics<parallel>, #tpu.dimension_semantics<arbitrary>], iteration_bounds = array<i64: 2, 1, 4>, scalar_prefetch = 0 : i64, scratch_operands = 1 : i64, tpu.core_type = #tpu.core_type<tc>, window_params = [{transform_indices = @transform_0, window_bounds = array<i64: 1, 3, 256>}, {transform_indices = @transform_1, window_bounds = array<i64: 1, 3, 256>}, {transform_indices = @transform_2, window_bounds = array<i64: 1, 8, 3>}, {transform_indices = @transform_3, window_bounds = array<i64: 1, 16, 3>}, {transform_indices = @transform_4, window_bounds = array<i64: 1, 3, 8>}, {transform_indices = @transform_5, window_bounds = array<i64: 1, 3, 256>}]} {
    %c0 = arith.constant 0 : index
    %c0_0 = arith.constant 0 : index
    %c0_1 = arith.constant 0 : index
    %0 = vector.load %arg3[%c0, %c0_0, %c0_1] : memref<1x3x256xf32, #tpu.memory_space<vmem>>, vector<1x3x256xf32>
    %1 = vector.shape_cast %0 : vector<1x3x256xf32> to vector<3x256xf32>
    %c0_2 = arith.constant 0 : index
    %c0_3 = arith.constant 0 : index
    %c0_4 = arith.constant 0 : index
    %2 = vector.load %arg4[%c0_2, %c0_3, %c0_4] : memref<1x3x256xf32, #tpu.memory_space<vmem>>, vector<1x3x256xf32>
    %3 = vector.shape_cast %2 : vector<1x3x256xf32> to vector<3x256xf32>
    %c0_5 = arith.constant 0 : index
    %c0_6 = arith.constant 0 : index
    %c0_7 = arith.constant 0 : index
    %4 = vector.load %arg5[%c0_5, %c0_6, %c0_7] : memref<1x8x3xf32, #tpu.memory_space<vmem>>, vector<1x8x3xf32>
    %5 = vector.shape_cast %4 : vector<1x8x3xf32> to vector<8x3xf32>
    %cst = arith.constant dense<0.000000e+00> : vector<8x256xf32>
    %6 = tpu.matmul %5, %3, %cst {dimension_numbers = #tpu.dot_dimension_numbers<[1], [0], [0], [1], [0, 0, 1, 1], [], []>} : vector<8x3xf32>, vector<3x256xf32>, vector<8x256xf32> -> vector<8x256xf32>
    %c0_8 = arith.constant 0 : index
    %c0_9 = arith.constant 0 : index
    %c0_10 = arith.constant 0 : index
    %7 = vector.load %arg6[%c0_8, %c0_9, %c0_10] : memref<1x16x3xf32, #tpu.memory_space<vmem>>, vector<1x16x3xf32>
    %8 = vector.shape_cast %7 : vector<1x16x3xf32> to vector<16x3xf32>
    %cst_11 = arith.constant dense<0.000000e+00> : vector<16x256xf32>
    %9 = tpu.matmul %8, %1, %cst_11 {dimension_numbers = #tpu.dot_dimension_numbers<[1], [0], [0], [1], [0, 0, 1, 1], [], []>} : vector<16x3xf32>, vector<3x256xf32>, vector<16x256xf32> -> vector<16x256xf32>
    %10 = vector.extract_strided_slice %9 {offsets = [0, 0], sizes = [8, 256], strides = [1, 1]} : vector<16x256xf32> to vector<8x256xf32>
    %11 = vector.extract_strided_slice %9 {offsets = [8, 0], sizes = [8, 256], strides = [1, 1]} : vector<16x256xf32> to vector<8x256xf32>
    %cst_12 = arith.constant 0.353553385 : f32
    %12 = vector.broadcast %cst_12 : f32 to vector<8x256xf32>
    %13 = arith.mulf %6, %12 : vector<8x256xf32>
    %cst_13 = arith.constant dense<0.000000e+00> : vector<256x256xf32>
    %14 = tpu.matmul %10, %13, %cst_13 {dimension_numbers = #tpu.dot_dimension_numbers<[0], [0], [1], [1], [0, 1, 1, 1], [], []>} : vector<8x256xf32>, vector<8x256xf32>, vector<256x256xf32> -> vector<256x256xf32>
    %cst_14 = arith.constant dense<0xFF800000> : vector<256xf32>
    %15 = vector.multi_reduction <maximumf>, %14, %cst_14 [0] : vector<256x256xf32> to vector<256xf32>
    %16 = vector.shape_cast %15 : vector<256xf32> to vector<1x256xf32>
    %17 = vector.broadcast %16 : vector<1x256xf32> to vector<256x256xf32>
    %18 = arith.subf %14, %17 : vector<256x256xf32>
    %19 = math.exp %18 : vector<256x256xf32>
    %cst_15 = arith.constant dense<0.000000e+00> : vector<256xf32>
    %20 = vector.multi_reduction <add>, %19, %cst_15 [0] : vector<256x256xf32> to vector<256xf32>
    %21 = vector.shape_cast %20 : vector<256xf32> to vector<1x256xf32>
    %22 = tpu.reciprocal %21 : vector<1x256xf32> -> vector<1x256xf32>
    %cst_16 = arith.constant dense<0.000000e+00> : vector<8x256xf32>
    %23 = tpu.matmul %11, %19, %cst_16 {dimension_numbers = #tpu.dot_dimension_numbers<[1], [0], [0], [1], [0, 0, 1, 1], [], []>} : vector<8x256xf32>, vector<256x256xf32>, vector<8x256xf32> -> vector<8x256xf32>
    %c0_17 = arith.constant 0 : index
    %c0_18 = arith.constant 0 : index
    %c0_19 = arith.constant 0 : index
    %24 = vector.load %arg7[%c0_17, %c0_18, %c0_19] : memref<1x3x8xf32, #tpu.memory_space<vmem>>, vector<1x3x8xf32>
    %25 = vector.shape_cast %24 : vector<1x3x8xf32> to vector<3x8xf32>
    %cst_20 = arith.constant dense<0.000000e+00> : vector<3x256xf32>
    %26 = tpu.matmul %25, %23, %cst_20 {dimension_numbers = #tpu.dot_dimension_numbers<[1], [0], [0], [1], [0, 0, 1, 1], [], []>} : vector<3x8xf32>, vector<8x256xf32>, vector<3x256xf32> -> vector<3x256xf32>
    %27 = vector.broadcast %22 : vector<1x256xf32> to vector<3x256xf32>
    %28 = arith.mulf %26, %27 : vector<3x256xf32>
    %c0_i32 = arith.constant 0 : i32
    %29 = arith.cmpi eq, %arg2, %c0_i32 : i32
    %30 = arith.extui %29 : i1 to i32
    %c0_i32_21 = arith.constant 0 : i32
    %31 = arith.cmpi ne, %30, %c0_i32_21 : i32
    scf.if %31 {
      %cst_27 = arith.constant 0.000000e+00 : f32
      %38 = vector.broadcast %cst_27 : f32 to vector<3x256xf32>
      %c0_28 = arith.constant 0 : index
      %c0_29 = arith.constant 0 : index
      %39 = vector.load %arg9[%c0_28, %c0_29] : memref<3x256xf32, #tpu.memory_space<vmem>>, vector<3x256xf32>
      tpu.vector_store %arg9[%c0_28, %c0_29], %38 {strides = array<i32>} : memref<3x256xf32, #tpu.memory_space<vmem>>, vector<3x256xf32>,
    } else {
    }
    %c0_22 = arith.constant 0 : index
    %c0_23 = arith.constant 0 : index
    %32 = vector.load %arg9[%c0_22, %c0_23] : memref<3x256xf32, #tpu.memory_space<vmem>>, vector<3x256xf32>
    %33 = arith.addf %32, %28 : vector<3x256xf32>
    %c0_24 = arith.constant 0 : index
    %c0_25 = arith.constant 0 : index
    %34 = vector.load %arg9[%c0_24, %c0_25] : memref<3x256xf32, #tpu.memory_space<vmem>>, vector<3x256xf32>
    tpu.vector_store %arg9[%c0_24, %c0_25], %33 {strides = array<i32>} : memref<3x256xf32, #tpu.memory_space<vmem>>, vector<3x256xf32>,
    %c3_i32 = arith.constant 3 : i32
    %35 = arith.cmpi eq, %arg2, %c3_i32 : i32
    %36 = arith.extui %35 : i1 to i32
    %c0_i32_26 = arith.constant 0 : i32
    %37 = arith.cmpi ne, %36, %c0_i32_26 : i32
    scf.if %37 {
      %c0_27 = arith.constant 0 : index
      %c0_28 = arith.constant 0 : index
      %38 = vector.load %arg9[%c0_27, %c0_28] : memref<3x256xf32, #tpu.memory_space<vmem>>, vector<3x256xf32>
      %c0_29 = arith.constant 0 : index
      %c0_30 = arith.constant 0 : index
      %c0_31 = arith.constant 0 : index
      %39 = vector.load %arg8[%c0_29, %c0_30, %c0_31] : memref<1x3x256xf32, #tpu.memory_space<vmem>>, vector<1x3x256xf32>
      %40 = vector.shape_cast %39 : vector<1x3x256xf32> to vector<3x256xf32>
      %41 = vector.shape_cast %38 : vector<3x256xf32> to vector<1x3x256xf32>
      tpu.vector_store %arg8[%c0_29, %c0_30, %c0_31], %41 {strides = array<i32>} : memref<1x3x256xf32, #tpu.memory_space<vmem>>, vector<1x3x256xf32>,
    } else {
    }
    return
  }
  func.func @transform_0(%arg0: i32, %arg1: i32, %arg2: i32) -> (i32, i32, i32) {
    %c0_i32 = arith.constant 0 : i32
    %c0_i32_0 = arith.constant 0 : i32
    %c0_i32_1 = arith.constant 0 : i32
    return %arg0, %c0_i32, %c0_i32_0 : i32, i32, i32
  }
  func.func @transform_1(%arg0: i32, %arg1: i32, %arg2: i32) -> (i32, i32, i32) {
    %c0_i32 = arith.constant 0 : i32
    %c0_i32_0 = arith.constant 0 : i32
    return %arg0, %c0_i32, %arg1 : i32, i32, i32
  }
  func.func @transform_2(%arg0: i32, %arg1: i32, %arg2: i32) -> (i32, i32, i32) {
    %c0_i32 = arith.constant 0 : i32
    %c0_i32_0 = arith.constant 0 : i32
    %c0_i32_1 = arith.constant 0 : i32
    return %arg2, %c0_i32, %c0_i32_0 : i32, i32, i32
  }
  func.func @transform_3(%arg0: i32, %arg1: i32, %arg2: i32) -> (i32, i32, i32) {
    %c0_i32 = arith.constant 0 : i32
    %c0_i32_0 = arith.constant 0 : i32
    %c0_i32_1 = arith.constant 0 : i32
    return %arg2, %c0_i32, %c0_i32_0 : i32, i32, i32
  }
  func.func @transform_4(%arg0: i32, %arg1: i32, %arg2: i32) -> (i32, i32, i32) {
    %c0_i32 = arith.constant 0 : i32
    %c0_i32_0 = arith.constant 0 : i32
    %c0_i32_1 = arith.constant 0 : i32
    return %arg2, %c0_i32, %c0_i32_0 : i32, i32, i32
  }
  func.func @transform_5(%arg0: i32, %arg1: i32, %arg2: i32) -> (i32, i32, i32) {
    %c0_i32 = arith.constant 0 : i32
    %c0_i32_0 = arith.constant 0 : i32
    return %arg0, %c0_i32, %arg1 : i32, i32, i32
  }
}

</mosaic_0001>

<llo_original>
// kernel: tpu_custom_call.1
$region0: #{tpu_custom_call.1}
  #allocation0 [shape = 'u32[]', space=smem, size = 0x4, offset = 0x4, fixed_abs, tag = 'smem constant byte address 0x4 - core index']
  #allocation1 [shape = 'u32[72,128]{1,0:T(1,128)}', space=vmem, size = 0x9000, scoped, tag = 'internal scratch']
  #allocation2 [shape = 'f32[3,256]{1,0:T(4,128)}', space=vmem, size = 0x1000, scoped, tag = 'scratch operand']
  %s0 = inlined_call_operand.vmem [shape: f32[2,3,256], index: 0, kind: input, shape index: {}]
  %s1 = inlined_call_operand.vmem [shape: f32[2,3,256], index: 1, kind: input, shape index: {}]
  %s2 = inlined_call_operand.vmem [shape: f32[4,8,3], index: 2, kind: input, shape index: {}]
  %s3 = inlined_call_operand.vmem [shape: f32[4,16,3], index: 3, kind: input, shape index: {}]
  %s4 = inlined_call_operand.vmem [shape: f32[4,3,8], index: 4, kind: input, shape index: {}]
  %s5 = inlined_call_operand.vmem [shape: f32[2,3,256], index: 5, kind: output, shape index: {}]
  %s6 = sld [smem:[#allocation0]]
  $region61: #{tpu_custom_call.1} parent=0
    _
  %s8 = ssub.s32 1, %s6
  %s9 = scalar_select 0, %s8, %s6
  loop: start=0, step=1, limit=10
  $region2: #{tpu_custom_call.1} parent=0 // loop_pre_header
    _
  $region3: #{tpu_custom_call.1} parent=0 // loop_header
    %s11 = sphi 0, %s15
    %p12 = scmp.ge.s32.totalorder %s11, 10
    %s18 = sphi 0, %s37
    %s19 = sphi 0, %s33
    %s20 = sphi 0, %s29
    %s21 = sphi 0, %s18
    %s22 = sphi 0, %s19
    %s23 = sphi 0, %s20
    %s24 = sphi 0, %s21
    %s25 = sphi 0, %s22
    %s26 = sphi 0, %s23
    %s40 = sphi 0, %s42
    %s43 = sphi 0, %s40
    %s44 = sphi 0, %s43
    %s60 = sphi 0, %s44
    %s68 = sphi 0, %s70
    %s71 = sphi 0, %s68
    %s72 = sphi 0, %s71
    %s88 = sphi 0, %s72
    %s94 = sphi 0, %s96
    %s97 = sphi 0, %s94
    %s98 = sphi 0, %s97
    %s114 = sphi 0, %s98
    %s120 = sphi 0, %s122
    %s123 = sphi 0, %s120
    %s124 = sphi 0, %s123
    %s140 = sphi 0, %s124
    %s146 = sphi 0, %s148
    %s149 = sphi 0, %s146
    %s150 = sphi 0, %s149
    %s166 = sphi 0, %s150
    %s174 = sphi 0, %s176
    %s177 = sphi 0, %s174
    %s178 = sphi 0, %s177
    %s194 = sphi 0, %s178
  $region4: #{tpu_custom_call.1} parent=0 // loop_header_branch
    %14 = sbr.rel (%p12) target = $region8
  $region5: #{tpu_custom_call.1} parent=0 // loop_body
    %s16 = ssub.s32 %s11, 1
    %s17 = ssub.s32 %s11, 2
    %s27 = sadd.s32 1, %s20
    %p28 = scmp.ge.s32.totalorder %s27, 4
    %s29 = scalar_select %p28, 0, %s27
    %s30 = sadd.s32 1, %s19
    %s31 = scalar_select %p28, %s30, %s19
    %p32 = scmp.ge.s32.totalorder %s31, 1
    %s33 = scalar_select %p32, 0, %s31
    %s34 = sadd.s32 1, %s18
    %s35 = scalar_select %p32, %s34, %s18
    %p36 = scmp.ge.s32.totalorder %s35, 2
    %s37 = scalar_select %p36, 0, %s35
    %s38 = ssub.s32 %s18, %s37
    %p39 = scmp.eq.s32.totalorder %s38, 0
    %s41 = sadd.s32 %s40, 1
    %s42 = scalar_select %p39, %s40, %s41
    %p45 = pneg %p39
    %p46 = scmp.eq.s32.totalorder %s11, 7
    %p47 = por %p45, %p46
    %p48 = scmp.ne.s32.totalorder %s40, %s43
    %p49 = scmp.eq.s32.totalorder %s11, 0
    %p50 = por %p48, %p49
    %p51 = scmp.ne.s32.totalorder %s40, %s43
    %p52 = scmp.eq.s32.totalorder %s16, 7
    %p53 = por %p51, %p52
    %p54 = scmp.ne.s32.totalorder %s43, %s44
    %p55 = scmp.eq.s32.totalorder %s16, 0
    %p56 = por %p54, %p55
    %p57 = scmp.ne.s32.totalorder %s43, %s44
    %p58 = scmp.eq.s32.totalorder %s17, 7
    %p59 = por %p57, %p58
    %p61 = scmp.ne.s32.totalorder %s44, %s60
    %p62 = scmp.eq.s32.totalorder %s17, 0
    %p63 = por %p61, %p62
    %s64 = ssub.s32 %s18, %s37
    %s65 = ssub.s32 %s19, %s33
    %s66 = sor.u32 %s64, %s65
    %p67 = scmp.eq.s32.totalorder %s66, 0
    %s69 = sadd.s32 %s68, 1
    %s70 = scalar_select %p67, %s68, %s69
    %p73 = pneg %p67
    %p74 = scmp.eq.s32.totalorder %s11, 7
    %p75 = por %p73, %p74
    %p76 = scmp.ne.s32.totalorder %s68, %s71
    %p77 = scmp.eq.s32.totalorder %s11, 0
    %p78 = por %p76, %p77
    %p79 = scmp.ne.s32.totalorder %s68, %s71
    %p80 = scmp.eq.s32.totalorder %s16, 7
    %p81 = por %p79, %p80
    %p82 = scmp.ne.s32.totalorder %s71, %s72
    %p83 = scmp.eq.s32.totalorder %s16, 0
    %p84 = por %p82, %p83
    %p85 = scmp.ne.s32.totalorder %s71, %s72
    %p86 = scmp.eq.s32.totalorder %s17, 7
    %p87 = por %p85, %p86
    %p89 = scmp.ne.s32.totalorder %s72, %s88
    %p90 = scmp.eq.s32.totalorder %s17, 0
    %p91 = por %p89, %p90
    %s92 = ssub.s32 %s20, %s29
    %p93 = scmp.eq.s32.totalorder %s92, 0
    %s95 = sadd.s32 %s94, 1
    %s96 = scalar_select %p93, %s94, %s95
    %p99 = pneg %p93
    %p100 = scmp.eq.s32.totalorder %s11, 7
    %p101 = por %p99, %p100
    %p102 = scmp.ne.s32.totalorder %s94, %s97
    %p103 = scmp.eq.s32.totalorder %s11, 0
    %p104 = por %p102, %p103
    %p105 = scmp.ne.s32.totalorder %s94, %s97
    %p106 = scmp.eq.s32.totalorder %s16, 7
    %p107 = por %p105, %p106
    %p108 = scmp.ne.s32.totalorder %s97, %s98
    %p109 = scmp.eq.s32.totalorder %s16, 0
    %p110 = por %p108, %p109
    %p111 = scmp.ne.s32.totalorder %s97, %s98
    %p112 = scmp.eq.s32.totalorder %s17, 7
    %p113 = por %p111, %p112
    %p115 = scmp.ne.s32.totalorder %s98, %s114
    %p116 = scmp.eq.s32.totalorder %s17, 0
    %p117 = por %p115, %p116
    %s118 = ssub.s32 %s20, %s29
    %p119 = scmp.eq.s32.totalorder %s118, 0
    %s121 = sadd.s32 %s120, 1
    %s122 = scalar_select %p119, %s120, %s121
    %p125 = pneg %p119
    %p126 = scmp.eq.s32.totalorder %s11, 7
    %p127 = por %p125, %p126
    %p128 = scmp.ne.s32.totalorder %s120, %s123
    %p129 = scmp.eq.s32.totalorder %s11, 0
    %p130 = por %p128, %p129
    %p131 = scmp.ne.s32.totalorder %s120, %s123
    %p132 = scmp.eq.s32.totalorder %s16, 7
    %p133 = por %p131, %p132
    %p134 = scmp.ne.s32.totalorder %s123, %s124
    %p135 = scmp.eq.s32.totalorder %s16, 0
    %p136 = por %p134, %p135
    %p137 = scmp.ne.s32.totalorder %s123, %s124
    %p138 = scmp.eq.s32.totalorder %s17, 7
    %p139 = por %p137, %p138
    %p141 = scmp.ne.s32.totalorder %s124, %s140
    %p142 = scmp.eq.s32.totalorder %s17, 0
    %p143 = por %p141, %p142
    %s144 = ssub.s32 %s20, %s29
    %p145 = scmp.eq.s32.totalorder %s144, 0
    %s147 = sadd.s32 %s146, 1
    %s148 = scalar_select %p145, %s146, %s147
    %p151 = pneg %p145
    %p152 = scmp.eq.s32.totalorder %s11, 7
    %p153 = por %p151, %p152
    %p154 = scmp.ne.s32.totalorder %s146, %s149
    %p155 = scmp.eq.s32.totalorder %s11, 0
    %p156 = por %p154, %p155
    %p157 = scmp.ne.s32.totalorder %s146, %s149
    %p158 = scmp.eq.s32.totalorder %s16, 7
    %p159 = por %p157, %p158
    %p160 = scmp.ne.s32.totalorder %s149, %s150
    %p161 = scmp.eq.s32.totalorder %s16, 0
    %p162 = por %p160, %p161
    %p163 = scmp.ne.s32.totalorder %s149, %s150
    %p164 = scmp.eq.s32.totalorder %s17, 7
    %p165 = por %p163, %p164
    %p167 = scmp.ne.s32.totalorder %s150, %s166
    %p168 = scmp.eq.s32.totalorder %s17, 0
    %p169 = por %p167, %p168
    %s170 = ssub.s32 %s18, %s37
    %s171 = ssub.s32 %s19, %s33
    %s172 = sor.u32 %s170, %s171
    %p173 = scmp.eq.s32.totalorder %s172, 0
    %s175 = sadd.s32 %s174, 1
    %s176 = scalar_select %p173, %s174, %s175
    %p179 = pneg %p173
    %p180 = scmp.eq.s32.totalorder %s11, 7
    %p181 = por %p179, %p180
    %p182 = scmp.ne.s32.totalorder %s174, %s177
    %p183 = scmp.eq.s32.totalorder %s11, 0
    %p184 = por %p182, %p183
    %p185 = scmp.ne.s32.totalorder %s174, %s177
    %p186 = scmp.eq.s32.totalorder %s16, 7
    %p187 = por %p185, %p186
    %p188 = scmp.ne.s32.totalorder %s177, %s178
    %p189 = scmp.eq.s32.totalorder %s16, 0
    %p190 = por %p188, %p189
    %p191 = scmp.ne.s32.totalorder %s177, %s178
    %p192 = scmp.eq.s32.totalorder %s17, 7
    %p193 = por %p191, %p192
    %p195 = scmp.ne.s32.totalorder %s178, %s194
    %p196 = scmp.eq.s32.totalorder %s17, 0
    %p197 = por %p195, %p196
    %p198 = scmp.le.s32.totalorder 1, %s11
    %p199 = scmp.lt.s32.totalorder %s11, 9
    %p200 = pnand %p198, %p199
    %p201 = pneg %p200
    // Predicated region
    $region9: #{tpu_custom_call.1} parent=5 // pred_check
      _
    $region10: #{tpu_custom_call.1} parent=5 // pred_check_branch
      %203 = sbr.rel (%p200) target = $region12
    $region11: #{tpu_custom_call.1} parent=5 // pred_region
      %s204 = ssub.s32 %s11, 1
    $region12: #{tpu_custom_call.1} parent=5 // pred_fallthru
      _
    %p205 = scmp.lt.s32.totalorder %s11, 8
    // Predicated region
    $region13: #{tpu_custom_call.1} parent=5 // pred_check
      %p206 = pneg %p205
    $region14: #{tpu_custom_call.1} parent=5 // pred_check_branch
      %208 = sbr.rel (%p206) target = $region16
    $region15: #{tpu_custom_call.1} parent=5 // pred_region
      // Predicated region
      $region17: #{tpu_custom_call.1} parent=15 // pred_check
        %p209 = pneg %p50
      $region18: #{tpu_custom_call.1} parent=15 // pred_check_branch
        %211 = sbr.rel (%p209) target = $region20
      $region19: #{tpu_custom_call.1} parent=15 // pred_region
        %p212 = scmp.lt.s32.totalorder %s18, 1
        %s213 = scalar_select %p212, %s18, 1
        %s214 = smul.addr %s213, 2
        %s215 = smul.addr %s214, 4
        %s216 = scalar_lea.vmem %s0, %s215
      $region20: #{tpu_custom_call.1} parent=15 // pred_fallthru
        _
      // Predicated region
      $region21: #{tpu_custom_call.1} parent=15 // pred_check
        %p217 = pneg %p78
      $region22: #{tpu_custom_call.1} parent=15 // pred_check_branch
        %219 = sbr.rel (%p217) target = $region24
      $region23: #{tpu_custom_call.1} parent=15 // pred_region
        %s220 = smul.u32 2, %s19
        %p221 = scmp.lt.s32.totalorder %s18, 1
        %s222 = scalar_select %p221, %s18, 1
        %p223 = scmp.lt.s32.totalorder %s220, 1
        %s224 = scalar_select %p223, %s220, 1
        %s225 = smul.addr %s222, 2
        %s226 = sadd.s32 %s224, %s225
        %s227 = smul.addr %s226, 4
        %s228 = scalar_lea.vmem %s1, %s227
        %s229 = smul.u32 2, %s19
      $region24: #{tpu_custom_call.1} parent=15 // pred_fallthru
        _
      // Predicated region
      $region25: #{tpu_custom_call.1} parent=15 // pred_check
        %p230 = pneg %p104
      $region26: #{tpu_custom_call.1} parent=15 // pred_check_branch
        %232 = sbr.rel (%p230) target = $region28
      $region27: #{tpu_custom_call.1} parent=15 // pred_region
        %p233 = scmp.lt.s32.totalorder %s20, 3
        %s234 = scalar_select %p233, %s20, 3
        %s235 = smul.addr %s234, 8
        %s236 = scalar_lea.vmem %s2, %s235
      $region28: #{tpu_custom_call.1} parent=15 // pred_fallthru
        _
      // Predicated region
      $region29: #{tpu_custom_call.1} parent=15 // pred_check
        %p237 = pneg %p130
      $region30: #{tpu_custom_call.1} parent=15 // pred_check_branch
        %239 = sbr.rel (%p237) target = $region32
      $region31: #{tpu_custom_call.1} parent=15 // pred_region
        %p240 = scmp.lt.s32.totalorder %s20, 3
        %s241 = scalar_select %p240, %s20, 3
        %s242 = smul.addr %s241, 2
        %s243 = smul.addr %s242, 8
        %s244 = scalar_lea.vmem %s3, %s243
      $region32: #{tpu_custom_call.1} parent=15 // pred_fallthru
        _
      // Predicated region
      $region33: #{tpu_custom_call.1} parent=15 // pred_check
        %p245 = pneg %p156
      $region34: #{tpu_custom_call.1} parent=15 // pred_check_branch
        %247 = sbr.rel (%p245) target = $region36
      $region35: #{tpu_custom_call.1} parent=15 // pred_region
        %p248 = scmp.lt.s32.totalorder %s20, 3
        %s249 = scalar_select %p248, %s20, 3
        %s250 = smul.addr %s249, 4
        %s251 = scalar_lea.vmem %s4, %s250
      $region36: #{tpu_custom_call.1} parent=15 // pred_fallthru
        _
    $region16: #{tpu_custom_call.1} parent=5 // pred_fallthru
      _
    %p252 = scmp.le.s32.totalorder 1, %s11
    %p253 = scmp.lt.s32.totalorder %s11, 9
    %p254 = pnand %p252, %p253
    %p255 = pneg %p254
    // Predicated region
    $region37: #{tpu_custom_call.1} parent=5 // pred_check
      _
    $region38: #{tpu_custom_call.1} parent=5 // pred_check_branch
      %257 = sbr.rel (%p254) target = $region40
    $region39: #{tpu_custom_call.1} parent=5 // pred_region
      %s258 = ssub.s32 %s11, 1
      %p259 = scmp.lt.s32.totalorder %s21, 1
      %s260 = scalar_select %p259, %s21, 1
      %s261 = smul.addr %s260, 2
      %s262 = smul.addr %s261, 4
      %s263 = scalar_lea.vmem %s0, %s262
      %p264 = pneg %p56
      %p265 = pneg %p53
      %s266 = smul.u32 2, %s22
      %p267 = scmp.lt.s32.totalorder %s21, 1
      %s268 = scalar_select %p267, %s21, 1
      %p269 = scmp.lt.s32.totalorder %s266, 1
      %s270 = scalar_select %p269, %s266, 1
      %s271 = smul.addr %s268, 2
      %s272 = sadd.s32 %s270, %s271
      %s273 = smul.addr %s272, 4
      %s274 = scalar_lea.vmem %s1, %s273
      %p275 = pneg %p84
      %p276 = pneg %p81
      %p277 = scmp.lt.s32.totalorder %s23, 3
      %s278 = scalar_select %p277, %s23, 3
      %s279 = smul.addr %s278, 8
      %s280 = scalar_lea.vmem %s2, %s279
      %p281 = pneg %p110
      %p282 = pneg %p107
      %p283 = scmp.lt.s32.totalorder %s23, 3
      %s284 = scalar_select %p283, %s23, 3
      %s285 = smul.addr %s284, 2
      %s286 = smul.addr %s285, 8
      %s287 = scalar_lea.vmem %s3, %s286
      %p288 = pneg %p136
      %p289 = pneg %p133
      %p290 = scmp.lt.s32.totalorder %s23, 3
      %s291 = scalar_select %p290, %s23, 3
      %s292 = smul.addr %s291, 4
      %s293 = scalar_lea.vmem %s4, %s292
      %p294 = pneg %p162
      %p295 = pneg %p159
      %p296 = pneg %p190
      %p297 = pneg %p187
      %s298 = smul.u32 2, %s22
      %p299 = scmp.lt.s32.totalorder %s21, 1
      %s300 = scalar_select %p299, %s21, 1
      %p301 = scmp.lt.s32.totalorder %s298, 1
      %s302 = scalar_select %p301, %s298, 1
      %s303 = smul.addr %s300, 2
      %s304 = sadd.s32 %s302, %s303
      %s305 = smul.addr %s304, 4
      %s306 = scalar_lea.vmem %s5, %s305
      %p307 = scmp.lt.s32.totalorder %s21, 1
      %s308 = scalar_select %p307, %s21, 1
      %s309 = smul.addr %s308, 2
      %s310 = smul.addr %s309, 4
      %s311 = scalar_lea.vmem %s0, %s310
      %s312 = smul.u32 2, %s22
      %p313 = scmp.lt.s32.totalorder %s21, 1
      %s314 = scalar_select %p313, %s21, 1
      %p315 = scmp.lt.s32.totalorder %s312, 1
      %s316 = scalar_select %p315, %s312, 1
      %s317 = smul.addr %s314, 2
      %s318 = sadd.s32 %s316, %s317
      %s319 = smul.addr %s318, 4
      %s320 = scalar_lea.vmem %s1, %s319
      %s321 = smul.u32 2, %s22
      %p322 = scmp.lt.s32.totalorder %s23, 3
      %s323 = scalar_select %p322, %s23, 3
      %s324 = smul.addr %s323, 8
      %s325 = scalar_lea.vmem %s2, %s324
      %p326 = scmp.lt.s32.totalorder %s23, 3
      %s327 = scalar_select %p326, %s23, 3
      %s328 = smul.addr %s327, 2
      %s329 = smul.addr %s328, 8
      %s330 = scalar_lea.vmem %s3, %s329
      %p331 = scmp.lt.s32.totalorder %s23, 3
      %s332 = scalar_select %p331, %s23, 3
      %s333 = smul.addr %s332, 4
      %s334 = scalar_lea.vmem %s4, %s333
      %s335 = smul.u32 2, %s22
      %p336 = scmp.lt.s32.totalorder %s21, 1
      %s337 = scalar_select %p336, %s21, 1
      %p338 = scmp.lt.s32.totalorder %s335, 1
      %s339 = scalar_select %p338, %s335, 1
      %s340 = smul.addr %s337, 2
      %s341 = sadd.s32 %s339, %s340
      %s342 = smul.addr %s341, 4
      %s343 = scalar_lea.vmem %s5, %s342
      %s344 = smul.u32 2, %s22
      %v345 = vld [vmem:[%s311] sm:$0x77]
      %v346 = vld [vmem:[%s320] sm:$0x77]
      %v347 = vld [vmem:[%s325] sm:$0xff]
      %349 = vst [vmem:[#allocation1] ss:$2 sm:$0xff] %v346
      %v350 = vld.sshfl [vmem:[#allocation1] sm:$0xff pattern:$0x75316420]
      %v351 = vld.sshfl [vmem:[#allocation1 + $0x8] sm:$0xff pattern:$0x75316420]
      %vm352 = vcmask 23552
      %v354 = vsel %vm352, %v347, 0
      %vm356 = vcmask 1042432
      %v357 = vsel %vm356, %v350, 0
      %v359 = vsel %vm356, %v351, 0
      %361 = vmatpush.msra.mxu0 0.0
      %362 = vmatpush.msra.mxu0 0.0
      %363 = vmatpush.msra.mxu0 0.0
      %364 = vmatpush.msra.mxu0 0.0
      %365 = vmatpush.msra.mxu0 0.0
      %366 = vmatpush.msra.mxu0 0.0
      %367 = vmatpush.msra.mxu0 0.0
      %368 = vmatpush.msra.mxu0 0.0
      %369 = vmatpush.msra.mxu0 0.0
      %370 = vmatpush.msra.mxu0 0.0
      %371 = vmatpush.msra.mxu0 0.0
      %372 = vmatpush.msra.mxu0 0.0
      %373 = vmatpush.msra.mxu0 0.0
      %374 = vmatpush.msra.mxu0 0.0
      %375 = vmatpush.msra.mxu0 0.0
      %376 = vmatpush.msra.mxu0 %v357
      %377 = vmatmul.f32.gmra.mxu0 %v354
      %v378 = vpop.f32.mrf.mxu0
      %v379 = vadd.f32 0.0, %v378
      %380 = vdwg.mxu0
      %381 = vmatpush.msra.mxu0 0.0
      %382 = vmatpush.msra.mxu0 0.0
      %383 = vmatpush.msra.mxu0 0.0
      %384 = vmatpush.msra.mxu0 0.0
      %385 = vmatpush.msra.mxu0 0.0
      %386 = vmatpush.msra.mxu0 0.0
      %387 = vmatpush.msra.mxu0 0.0
      %388 = vmatpush.msra.mxu0 0.0
      %389 = vmatpush.msra.mxu0 0.0
      %390 = vmatpush.msra.mxu0 0.0
      %391 = vmatpush.msra.mxu0 0.0
      %392 = vmatpush.msra.mxu0 0.0
      %393 = vmatpush.msra.mxu0 0.0
      %394 = vmatpush.msra.mxu0 0.0
      %395 = vmatpush.msra.mxu0 0.0
      %396 = vmatpush.msra.mxu0 %v359
      %397 = vmatmul.f32.gmra.mxu0 %v354
      %v398 = vpop.f32.mrf.mxu0
      %v399 = vadd.f32 0.0, %v398
      %400 = vdwg.mxu0
      %v401 = vld [vmem:[%s330] sm:$0xff]
      %v402 = vld [vmem:[%s330 + $0x8] sm:$0xff]
      %404 = vst [vmem:[#allocation1] ss:$2 sm:$0xff] %v345
      %v405 = vld.sshfl [vmem:[#allocation1] sm:$0xff pattern:$0x75316420]
      %v406 = vld.sshfl [vmem:[#allocation1 + $0x8] sm:$0xff pattern:$0x75316420]
      %v408 = vsel %vm352, %v401, 0
      %v411 = vsel %vm352, %v402, 0
      %v413 = vsel %vm356, %v405, 0
      %v415 = vsel %vm356, %v406, 0
      %417 = vmatpush.msra.mxu0 0.0
      %418 = vmatpush.msra.mxu0 0.0
      %419 = vmatpush.msra.mxu0 0.0
      %420 = vmatpush.msra.mxu0 0.0
      %421 = vmatpush.msra.mxu0 0.0
      %422 = vmatpush.msra.mxu0 0.0
      %423 = vmatpush.msra.mxu0 0.0
      %424 = vmatpush.msra.mxu0 0.0
      %425 = vmatpush.msra.mxu0 0.0
      %426 = vmatpush.msra.mxu0 0.0
      %427 = vmatpush.msra.mxu0 0.0
      %428 = vmatpush.msra.mxu0 0.0
      %429 = vmatpush.msra.mxu0 0.0
      %430 = vmatpush.msra.mxu0 0.0
      %431 = vmatpush.msra.mxu0 0.0
      %432 = vmatpush.msra.mxu0 %v413
      %433 = vmatmul.f32.gmra.mxu0 %v408
      %v434 = vpop.f32.mrf.mxu0
      %v435 = vadd.f32 0.0, %v434
      %436 = vmatmul.f32.gmra.mxu0 %v411
      %v437 = vpop.f32.mrf.mxu0
      %v438 = vadd.f32 0.0, %v437
      %439 = vdwg.mxu0
      %440 = vmatpush.msra.mxu0 0.0
      %441 = vmatpush.msra.mxu0 0.0
      %442 = vmatpush.msra.mxu0 0.0
      %443 = vmatpush.msra.mxu0 0.0
      %444 = vmatpush.msra.mxu0 0.0
      %445 = vmatpush.msra.mxu0 0.0
      %446 = vmatpush.msra.mxu0 0.0
      %447 = vmatpush.msra.mxu0 0.0
      %448 = vmatpush.msra.mxu0 0.0
      %449 = vmatpush.msra.mxu0 0.0
      %450 = vmatpush.msra.mxu0 0.0
      %451 = vmatpush.msra.mxu0 0.0
      %452 = vmatpush.msra.mxu0 0.0
      %453 = vmatpush.msra.mxu0 0.0
      %454 = vmatpush.msra.mxu0 0.0
      %455 = vmatpush.msra.mxu0 %v415
      %456 = vmatmul.f32.gmra.mxu0 %v408
      %v457 = vpop.f32.mrf.mxu0
      %v458 = vadd.f32 0.0, %v457
      %459 = vmatmul.f32.gmra.mxu0 %v411
      %v460 = vpop.f32.mrf.mxu0
      %v461 = vadd.f32 0.0, %v460
      %462 = vdwg.mxu0
      %v463 = vmul.f32 %v379, 0.35355338
      %v464 = vmul.f32 %v399, 0.35355338
      %465 = vxpose.xlu0.b32.start [1/16] %v435, 128
      %466 = vxpose.xlu0.b32.cont [2/16] 0.0, 128
      %467 = vxpose.xlu0.b32.cont [3/16] 0.0, 128
      %468 = vxpose.xlu0.b32.cont [4/16] 0.0, 128
      %469 = vxpose.xlu0.b32.cont [5/16] 0.0, 128
      %470 = vxpose.xlu0.b32.cont [6/16] 0.0, 128
      %471 = vxpose.xlu0.b32.cont [7/16] 0.0, 128
      %472 = vxpose.xlu0.b32.cont [8/16] 0.0, 128
      %473 = vxpose.xlu0.b32.cont [9/16] 0.0, 128
      %474 = vxpose.xlu0.b32.cont [10/16] 0.0, 128
      %475 = vxpose.xlu0.b32.cont [11/16] 0.0, 128
      %476 = vxpose.xlu0.b32.cont [12/16] 0.0, 128
      %477 = vxpose.xlu0.b32.cont [13/16] 0.0, 128
      %478 = vxpose.xlu0.b32.cont [14/16] 0.0, 128
      %479 = vxpose.xlu0.b32.cont [15/16] 0.0, 128
      %480 = vxpose.xlu0.b32.end [16/16] 0.0, 128
      %v481 = vpop.trf.xlu0
      %v482 = vpop.trf.xlu0
      %v483 = vpop.trf.xlu0
      %v484 = vpop.trf.xlu0
      %v485 = vpop.trf.xlu0
      %v486 = vpop.trf.xlu0
      %v487 = vpop.trf.xlu0
      %v488 = vpop.trf.xlu0
      %v489 = vpop.trf.xlu0
      %v490 = vpop.trf.xlu0
      %v491 = vpop.trf.xlu0
      %v492 = vpop.trf.xlu0
      %v493 = vpop.trf.xlu0
      %v494 = vpop.trf.xlu0
      %v495 = vpop.trf.xlu0
      %v496 = vpop.trf.xlu0
      %497 = vxpose.xlu0.b32.start [1/16] %v458, 128
      %498 = vxpose.xlu0.b32.cont [2/16] 0.0, 128
      %499 = vxpose.xlu0.b32.cont [3/16] 0.0, 128
      %500 = vxpose.xlu0.b32.cont [4/16] 0.0, 128
      %501 = vxpose.xlu0.b32.cont [5/16] 0.0, 128
      %502 = vxpose.xlu0.b32.cont [6/16] 0.0, 128
      %503 = vxpose.xlu0.b32.cont [7/16] 0.0, 128
      %504 = vxpose.xlu0.b32.cont [8/16] 0.0, 128
      %505 = vxpose.xlu0.b32.cont [9/16] 0.0, 128
      %506 = vxpose.xlu0.b32.cont [10/16] 0.0, 128
      %507 = vxpose.xlu0.b32.cont [11/16] 0.0, 128
      %508 = vxpose.xlu0.b32.cont [12/16] 0.0, 128
      %509 = vxpose.xlu0.b32.cont [13/16] 0.0, 128
      %510 = vxpose.xlu0.b32.cont [14/16] 0.0, 128
      %511 = vxpose.xlu0.b32.cont [15/16] 0.0, 128
      %512 = vxpose.xlu0.b32.end [16/16] 0.0, 128
      %v513 = vpop.trf.xlu0
      %v514 = vpop.trf.xlu0
      %v515 = vpop.trf.xlu0
      %v516 = vpop.trf.xlu0
      %v517 = vpop.trf.xlu0
      %v518 = vpop.trf.xlu0
      %v519 = vpop.trf.xlu0
      %v520 = vpop.trf.xlu0
      %v521 = vpop.trf.xlu0
      %v522 = vpop.trf.xlu0
      %v523 = vpop.trf.xlu0
      %v524 = vpop.trf.xlu0
      %v525 = vpop.trf.xlu0
      %v526 = vpop.trf.xlu0
      %v527 = vpop.trf.xlu0
      %v528 = vpop.trf.xlu0
      %vm529 = vcmask 64512
      %v531 = vsel %vm529, %v481, 0
      %v534 = vsel %vm529, %v482, 0
      %v537 = vsel %vm529, %v483, 0
      %v540 = vsel %vm529, %v484, 0
      %v543 = vsel %vm529, %v485, 0
      %v546 = vsel %vm529, %v486, 0
      %v549 = vsel %vm529, %v487, 0
      %v552 = vsel %vm529, %v488, 0
      %v555 = vsel %vm529, %v489, 0
      %v558 = vsel %vm529, %v490, 0
      %v561 = vsel %vm529, %v491, 0
      %v564 = vsel %vm529, %v492, 0
      %v567 = vsel %vm529, %v493, 0
      %v570 = vsel %vm529, %v494, 0
      %v573 = vsel %vm529, %v495, 0
      %v576 = vsel %vm529, %v496, 0
      %v579 = vsel %vm529, %v513, 0
      %v582 = vsel %vm529, %v514, 0
      %v585 = vsel %vm529, %v515, 0
      %v588 = vsel %vm529, %v516, 0
      %v591 = vsel %vm529, %v517, 0
      %v594 = vsel %vm529, %v518, 0
      %v597 = vsel %vm529, %v519, 0
      %v600 = vsel %vm529, %v520, 0
      %v603 = vsel %vm529, %v521, 0
      %v606 = vsel %vm529, %v522, 0
      %v609 = vsel %vm529, %v523, 0
      %v612 = vsel %vm529, %v524, 0
      %v615 = vsel %vm529, %v525, 0
      %v618 = vsel %vm529, %v526, 0
      %v621 = vsel %vm529, %v527, 0
      %v624 = vsel %vm529, %v528, 0
      %626 = vmatpush.msra.mxu0 0.0
      %627 = vmatpush.msra.mxu0 0.0
      %628 = vmatpush.msra.mxu0 0.0
      %629 = vmatpush.msra.mxu0 0.0
      %630 = vmatpush.msra.mxu0 0.0
      %631 = vmatpush.msra.mxu0 0.0
      %632 = vmatpush.msra.mxu0 0.0
      %633 = vmatpush.msra.mxu0 0.0
      %634 = vmatpush.msra.mxu0 0.0
      %635 = vmatpush.msra.mxu0 0.0
      %636 = vmatpush.msra.mxu0 0.0
      %637 = vmatpush.msra.mxu0 0.0
      %638 = vmatpush.msra.mxu0 0.0
      %639 = vmatpush.msra.mxu0 0.0
      %640 = vmatpush.msra.mxu0 0.0
      %641 = vmatpush.msra.mxu0 %v463
      %642 = vmatmul.f32.gmra.mxu0 %v531
      %v643 = vpop.f32.mrf.mxu0
      %v644 = vadd.f32 0.0, %v643
      %645 = vmatmul.f32.gmra.mxu0 %v534
      %v646 = vpop.f32.mrf.mxu0
      %v647 = vadd.f32 0.0, %v646
      %648 = vmatmul.f32.gmra.mxu0 %v537
      %v649 = vpop.f32.mrf.mxu0
      %v650 = vadd.f32 0.0, %v649
      %651 = vmatmul.f32.gmra.mxu0 %v540
      %v652 = vpop.f32.mrf.mxu0
      %v653 = vadd.f32 0.0, %v652
      %654 = vmatmul.f32.gmra.mxu0 %v543
      %v655 = vpop.f32.mrf.mxu0
      %v656 = vadd.f32 0.0, %v655
      %657 = vmatmul.f32.gmra.mxu0 %v546
      %v658 = vpop.f32.mrf.mxu0
      %v659 = vadd.f32 0.0, %v658
      %660 = vmatmul.f32.gmra.mxu0 %v549
      %v661 = vpop.f32.mrf.mxu0
      %v662 = vadd.f32 0.0, %v661
      %663 = vmatmul.f32.gmra.mxu0 %v552
      %v664 = vpop.f32.mrf.mxu0
      %v665 = vadd.f32 0.0, %v664
      %666 = vmatmul.f32.gmra.mxu0 %v555
      %v667 = vpop.f32.mrf.mxu0
      %v668 = vadd.f32 0.0, %v667
      %669 = vmatmul.f32.gmra.mxu0 %v558
      %v670 = vpop.f32.mrf.mxu0
      %v671 = vadd.f32 0.0, %v670
      %672 = vmatmul.f32.gmra.mxu0 %v561
      %v673 = vpop.f32.mrf.mxu0
      %v674 = vadd.f32 0.0, %v673
      %675 = vmatmul.f32.gmra.mxu0 %v564
      %v676 = vpop.f32.mrf.mxu0
      %v677 = vadd.f32 0.0, %v676
      %678 = vmatmul.f32.gmra.mxu0 %v567
      %v679 = vpop.f32.mrf.mxu0
      %v680 = vadd.f32 0.0, %v679
      %681 = vmatmul.f32.gmra.mxu0 %v570
      %v682 = vpop.f32.mrf.mxu0
      %v683 = vadd.f32 0.0, %v682
      %684 = vmatmul.f32.gmra.mxu0 %v573
      %v685 = vpop.f32.mrf.mxu0
      %v686 = vadd.f32 0.0, %v685
      %687 = vmatmul.f32.gmra.mxu0 %v576
      %v688 = vpop.f32.mrf.mxu0
      %v689 = vadd.f32 0.0, %v688
      %690 = vmatmul.f32.gmra.mxu0 %v579
      %v691 = vpop.f32.mrf.mxu0
      %v692 = vadd.f32 0.0, %v691
      %693 = vmatmul.f32.gmra.mxu0 %v582
      %v694 = vpop.f32.mrf.mxu0
      %v695 = vadd.f32 0.0, %v694
      %696 = vmatmul.f32.gmra.mxu0 %v585
      %v697 = vpop.f32.mrf.mxu0
      %v698 = vadd.f32 0.0, %v697
      %699 = vmatmul.f32.gmra.mxu0 %v588
      %v700 = vpop.f32.mrf.mxu0
      %v701 = vadd.f32 0.0, %v700
      %702 = vmatmul.f32.gmra.mxu0 %v591
      %v703 = vpop.f32.mrf.mxu0
      %v704 = vadd.f32 0.0, %v703
      %705 = vmatmul.f32.gmra.mxu0 %v594
      %v706 = vpop.f32.mrf.mxu0
      %v707 = vadd.f32 0.0, %v706
      %708 = vmatmul.f32.gmra.mxu0 %v597
      %v709 = vpop.f32.mrf.mxu0
      %v710 = vadd.f32 0.0, %v709
      %711 = vmatmul.f32.gmra.mxu0 %v600
      %v712 = vpop.f32.mrf.mxu0
      %v713 = vadd.f32 0.0, %v712
      %714 = vmatmul.f32.gmra.mxu0 %v603
      %v715 = vpop.f32.mrf.mxu0
      %v716 = vadd.f32 0.0, %v715
      %717 = vmatmul.f32.gmra.mxu0 %v606
      %v718 = vpop.f32.mrf.mxu0
      %v719 = vadd.f32 0.0, %v718
      %720 = vmatmul.f32.gmra.mxu0 %v609
      %v721 = vpop.f32.mrf.mxu0
      %v722 = vadd.f32 0.0, %v721
      %723 = vmatmul.f32.gmra.mxu0 %v612
      %v724 = vpop.f32.mrf.mxu0
      %v725 = vadd.f32 0.0, %v724
      %726 = vmatmul.f32.gmra.mxu0 %v615
      %v727 = vpop.f32.mrf.mxu0
      %v728 = vadd.f32 0.0, %v727
      %729 = vmatmul.f32.gmra.mxu0 %v618
      %v730 = vpop.f32.mrf.mxu0
      %v731 = vadd.f32 0.0, %v730
      %732 = vmatmul.f32.gmra.mxu0 %v621
      %v733 = vpop.f32.mrf.mxu0
      %v734 = vadd.f32 0.0, %v733
      %735 = vmatmul.f32.gmra.mxu0 %v624
      %v736 = vpop.f32.mrf.mxu0
      %v737 = vadd.f32 0.0, %v736
      %738 = vdwg.mxu0
      %739 = vmatpush.msra.mxu0 0.0
      %740 = vmatpush.msra.mxu0 0.0
      %741 = vmatpush.msra.mxu0 0.0
      %742 = vmatpush.msra.mxu0 0.0
      %743 = vmatpush.msra.mxu0 0.0
      %744 = vmatpush.msra.mxu0 0.0
      %745 = vmatpush.msra.mxu0 0.0
      %746 = vmatpush.msra.mxu0 0.0
      %747 = vmatpush.msra.mxu0 0.0
      %748 = vmatpush.msra.mxu0 0.0
      %749 = vmatpush.msra.mxu0 0.0
      %750 = vmatpush.msra.mxu0 0.0
      %751 = vmatpush.msra.mxu0 0.0
      %752 = vmatpush.msra.mxu0 0.0
      %753 = vmatpush.msra.mxu0 0.0
      %754 = vmatpush.msra.mxu0 %v464
      %755 = vmatmul.f32.gmra.mxu0 %v531
      %v756 = vpop.f32.mrf.mxu0
      %v757 = vadd.f32 0.0, %v756
      %758 = vmatmul.f32.gmra.mxu0 %v534
      %v759 = vpop.f32.mrf.mxu0
      %v760 = vadd.f32 0.0, %v759
      %761 = vmatmul.f32.gmra.mxu0 %v537
      %v762 = vpop.f32.mrf.mxu0
      %v763 = vadd.f32 0.0, %v762
      %764 = vmatmul.f32.gmra.mxu0 %v540
      %v765 = vpop.f32.mrf.mxu0
      %v766 = vadd.f32 0.0, %v765
      %767 = vmatmul.f32.gmra.mxu0 %v543
      %v768 = vpop.f32.mrf.mxu0
      %v769 = vadd.f32 0.0, %v768
      %770 = vmatmul.f32.gmra.mxu0 %v546
      %v771 = vpop.f32.mrf.mxu0
      %v772 = vadd.f32 0.0, %v771
      %773 = vmatmul.f32.gmra.mxu0 %v549
      %v774 = vpop.f32.mrf.mxu0
      %v775 = vadd.f32 0.0, %v774
      %776 = vmatmul.f32.gmra.mxu0 %v552
      %v777 = vpop.f32.mrf.mxu0
      %v778 = vadd.f32 0.0, %v777
      %779 = vmatmul.f32.gmra.mxu0 %v555
      %v780 = vpop.f32.mrf.mxu0
      %v781 = vadd.f32 0.0, %v780
      %782 = vmatmul.f32.gmra.mxu0 %v558
      %v783 = vpop.f32.mrf.mxu0
      %v784 = vadd.f32 0.0, %v783
      %785 = vmatmul.f32.gmra.mxu0 %v561
      %v786 = vpop.f32.mrf.mxu0
      %v787 = vadd.f32 0.0, %v786
      %788 = vmatmul.f32.gmra.mxu0 %v564
      %v789 = vpop.f32.mrf.mxu0
      %v790 = vadd.f32 0.0, %v789
      %791 = vmatmul.f32.gmra.mxu0 %v567
      %v792 = vpop.f32.mrf.mxu0
      %v793 = vadd.f32 0.0, %v792
      %794 = vmatmul.f32.gmra.mxu0 %v570
      %v795 = vpop.f32.mrf.mxu0
      %v796 = vadd.f32 0.0, %v795
      %797 = vmatmul.f32.gmra.mxu0 %v573
      %v798 = vpop.f32.mrf.mxu0
      %v799 = vadd.f32 0.0, %v798
      %800 = vmatmul.f32.gmra.mxu0 %v576
      %v801 = vpop.f32.mrf.mxu0
      %v802 = vadd.f32 0.0, %v801
      %803 = vmatmul.f32.gmra.mxu0 %v579
      %v804 = vpop.f32.mrf.mxu0
      %v805 = vadd.f32 0.0, %v804
      %806 = vmatmul.f32.gmra.mxu0 %v582
      %v807 = vpop.f32.mrf.mxu0
      %v808 = vadd.f32 0.0, %v807
      %809 = vmatmul.f32.gmra.mxu0 %v585
      %v810 = vpop.f32.mrf.mxu0
      %v811 = vadd.f32 0.0, %v810
      %812 = vmatmul.f32.gmra.mxu0 %v588
      %v813 = vpop.f32.mrf.mxu0
      %v814 = vadd.f32 0.0, %v813
      %815 = vmatmul.f32.gmra.mxu0 %v591
      %v816 = vpop.f32.mrf.mxu0
      %v817 = vadd.f32 0.0, %v816
      %818 = vmatmul.f32.gmra.mxu0 %v594
      %v819 = vpop.f32.mrf.mxu0
      %v820 = vadd.f32 0.0, %v819
      %821 = vmatmul.f32.gmra.mxu0 %v597
      %v822 = vpop.f32.mrf.mxu0
      %v823 = vadd.f32 0.0, %v822
      %824 = vmatmul.f32.gmra.mxu0 %v600
      %v825 = vpop.f32.mrf.mxu0
      %v826 = vadd.f32 0.0, %v825
      %827 = vmatmul.f32.gmra.mxu0 %v603
      %v828 = vpop.f32.mrf.mxu0
      %v829 = vadd.f32 0.0, %v828
      %830 = vmatmul.f32.gmra.mxu0 %v606
      %v831 = vpop.f32.mrf.mxu0
      %v832 = vadd.f32 0.0, %v831
      %833 = vmatmul.f32.gmra.mxu0 %v609
      %v834 = vpop.f32.mrf.mxu0
      %v835 = vadd.f32 0.0, %v834
      %836 = vmatmul.f32.gmra.mxu0 %v612
      %v837 = vpop.f32.mrf.mxu0
      %v838 = vadd.f32 0.0, %v837
      %839 = vmatmul.f32.gmra.mxu0 %v615
      %v840 = vpop.f32.mrf.mxu0
      %v841 = vadd.f32 0.0, %v840
      %842 = vmatmul.f32.gmra.mxu0 %v618
      %v843 = vpop.f32.mrf.mxu0
      %v844 = vadd.f32 0.0, %v843
      %845 = vmatmul.f32.gmra.mxu0 %v621
      %v846 = vpop.f32.mrf.mxu0
      %v847 = vadd.f32 0.0, %v846
      %848 = vmatmul.f32.gmra.mxu0 %v624
      %v849 = vpop.f32.mrf.mxu0
      %v850 = vadd.f32 0.0, %v849
      %851 = vdwg.mxu0
      %v852 = vmax.f32 %v644, %v650
      %v853 = vmax.f32 %v647, %v653
      %v854 = vmax.f32 %v852, %v656
      %v855 = vmax.f32 %v853, %v659
      %v856 = vmax.f32 %v854, %v662
      %v857 = vmax.f32 %v855, %v665
      %v858 = vmax.f32 %v856, %v668
      %v859 = vmax.f32 %v857, %v671
      %v860 = vmax.f32 %v858, %v674
      %v861 = vmax.f32 %v859, %v677
      %v862 = vmax.f32 %v860, %v680
      %v863 = vmax.f32 %v861, %v683
      %v864 = vmax.f32 %v862, %v686
      %v865 = vmax.f32 %v863, %v689
      %v866 = vmax.f32 %v864, %v692
      %v867 = vmax.f32 %v865, %v695
      %v868 = vmax.f32 %v866, %v698
      %v869 = vmax.f32 %v867, %v701
      %v870 = vmax.f32 %v868, %v704
      %v871 = vmax.f32 %v869, %v707
      %v872 = vmax.f32 %v870, %v710
      %v873 = vmax.f32 %v871, %v713
      %v874 = vmax.f32 %v872, %v716
      %v875 = vmax.f32 %v873, %v719
      %v876 = vmax.f32 %v874, %v722
      %v877 = vmax.f32 %v875, %v725
      %v878 = vmax.f32 %v876, %v728
      %v879 = vmax.f32 %v877, %v731
      %v880 = vmax.f32 %v878, %v734
      %v881 = vmax.f32 %v879, %v737
      %v882 = vmax.f32 %v880, %v881
      %v883 = vrot.slane %v882, 4
      %v884 = vmax.f32 %v882, %v883
      %v885 = vrot.slane %v884, 2
      %v886 = vmax.f32 %v884, %v885
      %v887 = vrot.slane %v886, 1
      %v888 = vmax.f32 %v886, %v887
      %v889 = vmax.f32 %v757, %v763
      %v890 = vmax.f32 %v760, %v766
      %v891 = vmax.f32 %v889, %v769
      %v892 = vmax.f32 %v890, %v772
      %v893 = vmax.f32 %v891, %v775
      %v894 = vmax.f32 %v892, %v778
      %v895 = vmax.f32 %v893, %v781
      %v896 = vmax.f32 %v894, %v784
      %v897 = vmax.f32 %v895, %v787
      %v898 = vmax.f32 %v896, %v790
      %v899 = vmax.f32 %v897, %v793
      %v900 = vmax.f32 %v898, %v796
      %v901 = vmax.f32 %v899, %v799
      %v902 = vmax.f32 %v900, %v802
      %v903 = vmax.f32 %v901, %v805
      %v904 = vmax.f32 %v902, %v808
      %v905 = vmax.f32 %v903, %v811
      %v906 = vmax.f32 %v904, %v814
      %v907 = vmax.f32 %v905, %v817
      %v908 = vmax.f32 %v906, %v820
      %v909 = vmax.f32 %v907, %v823
      %v910 = vmax.f32 %v908, %v826
      %v911 = vmax.f32 %v909, %v829
      %v912 = vmax.f32 %v910, %v832
      %v913 = vmax.f32 %v911, %v835
      %v914 = vmax.f32 %v912, %v838
      %v915 = vmax.f32 %v913, %v841
      %v916 = vmax.f32 %v914, %v844
      %v917 = vmax.f32 %v915, %v847
      %v918 = vmax.f32 %v916, %v850
      %v919 = vmax.f32 %v917, %v918
      %v920 = vrot.slane %v919, 4
      %v921 = vmax.f32 %v919, %v920
      %v922 = vrot.slane %v921, 2
      %v923 = vmax.f32 %v921, %v922
      %v924 = vrot.slane %v923, 1
      %v925 = vmax.f32 %v923, %v924
      %v926 = vsub.f32 %v644, %v888
      %v927 = vsub.f32 %v757, %v925
      %v928 = vsub.f32 %v647, %v888
      %v929 = vsub.f32 %v760, %v925
      %v930 = vsub.f32 %v650, %v888
      %v931 = vsub.f32 %v763, %v925
      %v932 = vsub.f32 %v653, %v888
      %v933 = vsub.f32 %v766, %v925
      %v934 = vsub.f32 %v656, %v888
      %v935 = vsub.f32 %v769, %v925
      %v936 = vsub.f32 %v659, %v888
      %v937 = vsub.f32 %v772, %v925
      %v938 = vsub.f32 %v662, %v888
      %v939 = vsub.f32 %v775, %v925
      %v940 = vsub.f32 %v665, %v888
      %v941 = vsub.f32 %v778, %v925
      %v942 = vsub.f32 %v668, %v888
      %v943 = vsub.f32 %v781, %v925
      %v944 = vsub.f32 %v671, %v888
      %v945 = vsub.f32 %v784, %v925
      %v946 = vsub.f32 %v674, %v888
      %v947 = vsub.f32 %v787, %v925
      %v948 = vsub.f32 %v677, %v888
      %v949 = vsub.f32 %v790, %v925
      %v950 = vsub.f32 %v680, %v888
      %v951 = vsub.f32 %v793, %v925
      %v952 = vsub.f32 %v683, %v888
      %v953 = vsub.f32 %v796, %v925
      %v954 = vsub.f32 %v686, %v888
      %v955 = vsub.f32 %v799, %v925
      %v956 = vsub.f32 %v689, %v888
      %v957 = vsub.f32 %v802, %v925
      %v958 = vsub.f32 %v692, %v888
      %v959 = vsub.f32 %v805, %v925
      %v960 = vsub.f32 %v695, %v888
      %v961 = vsub.f32 %v808, %v925
      %v962 = vsub.f32 %v698, %v888
      %v963 = vsub.f32 %v811, %v925
      %v964 = vsub.f32 %v701, %v888
      %v965 = vsub.f32 %v814, %v925
      %v966 = vsub.f32 %v704, %v888
      %v967 = vsub.f32 %v817, %v925
      %v968 = vsub.f32 %v707, %v888
      %v969 = vsub.f32 %v820, %v925
      %v970 = vsub.f32 %v710, %v888
      %v971 = vsub.f32 %v823, %v925
      %v972 = vsub.f32 %v713, %v888
      %v973 = vsub.f32 %v826, %v925
      %v974 = vsub.f32 %v716, %v888
      %v975 = vsub.f32 %v829, %v925
      %v976 = vsub.f32 %v719, %v888
      %v977 = vsub.f32 %v832, %v925
      %v978 = vsub.f32 %v722, %v888
      %v979 = vsub.f32 %v835, %v925
      %v980 = vsub.f32 %v725, %v888
      %v981 = vsub.f32 %v838, %v925
      %v982 = vsub.f32 %v728, %v888
      %v983 = vsub.f32 %v841, %v925
      %v984 = vsub.f32 %v731, %v888
      %v985 = vsub.f32 %v844, %v925
      %v986 = vsub.f32 %v734, %v888
      %v987 = vsub.f32 %v847, %v925
      %v988 = vsub.f32 %v737, %v888
      %v989 = vsub.f32 %v850, %v925
      %v990 = vmul.f32 %v926, 1.442695
      %v991 = vpow.pop %v990
      %v992 = vmul.f32 %v927, 1.442695
      %v993 = vpow.pop %v992
      %v994 = vmul.f32 %v928, 1.442695
      %v995 = vpow.pop %v994
      %v996 = vmul.f32 %v929, 1.442695
      %v997 = vpow.pop %v996
      %v998 = vmul.f32 %v930, 1.442695
      %v999 = vpow.pop %v998
      %v1000 = vmul.f32 %v931, 1.442695
      %v1001 = vpow.pop %v1000
      %v1002 = vmul.f32 %v932, 1.442695
      %v1003 = vpow.pop %v1002
      %v1004 = vmul.f32 %v933, 1.442695
      %v1005 = vpow.pop %v1004
      %v1006 = vmul.f32 %v934, 1.442695
      %v1007 = vpow.pop %v1006
      %v1008 = vmul.f32 %v935, 1.442695
      %v1009 = vpow.pop %v1008
      %v1010 = vmul.f32 %v936, 1.442695
      %v1011 = vpow.pop %v1010
      %v1012 = vmul.f32 %v937, 1.442695
      %v1013 = vpow.pop %v1012
      %v1014 = vmul.f32 %v938, 1.442695
      %v1015 = vpow.pop %v1014
      %v1016 = vmul.f32 %v939, 1.442695
      %v1017 = vpow.pop %v1016
      %v1018 = vmul.f32 %v940, 1.442695
      %v1019 = vpow.pop %v1018
      %v1020 = vmul.f32 %v941, 1.442695
      %v1021 = vpow.pop %v1020
      %v1022 = vmul.f32 %v942, 1.442695
      %v1023 = vpow.pop %v1022
      %v1024 = vmul.f32 %v943, 1.442695
      %v1025 = vpow.pop %v1024
      %v1026 = vmul.f32 %v944, 1.442695
      %v1027 = vpow.pop %v1026
      %v1028 = vmul.f32 %v945, 1.442695
      %v1029 = vpow.pop %v1028
      %v1030 = vmul.f32 %v946, 1.442695
      %v1031 = vpow.pop %v1030
      %v1032 = vmul.f32 %v947, 1.442695
      %v1033 = vpow.pop %v1032
      %v1034 = vmul.f32 %v948, 1.442695
      %v1035 = vpow.pop %v1034
      %v1036 = vmul.f32 %v949, 1.442695
      %v1037 = vpow.pop %v1036
      %v1038 = vmul.f32 %v950, 1.442695
      %v1039 = vpow.pop %v1038
      %v1040 = vmul.f32 %v951, 1.442695
      %v1041 = vpow.pop %v1040
      %v1042 = vmul.f32 %v952, 1.442695
      %v1043 = vpow.pop %v1042
      %v1044 = vmul.f32 %v953, 1.442695
      %v1045 = vpow.pop %v1044
      %v1046 = vmul.f32 %v954, 1.442695
      %v1047 = vpow.pop %v1046
      %v1048 = vmul.f32 %v955, 1.442695
      %v1049 = vpow.pop %v1048
      %v1050 = vmul.f32 %v956, 1.442695
      %v1051 = vpow.pop %v1050
      %v1052 = vmul.f32 %v957, 1.442695
      %v1053 = vpow.pop %v1052
      %v1054 = vmul.f32 %v958, 1.442695
      %v1055 = vpow.pop %v1054
      %v1056 = vmul.f32 %v959, 1.442695
      %v1057 = vpow.pop %v1056
      %v1058 = vmul.f32 %v960, 1.442695
      %v1059 = vpow.pop %v1058
      %v1060 = vmul.f32 %v961, 1.442695
      %v1061 = vpow.pop %v1060
      %v1062 = vmul.f32 %v962, 1.442695
      %v1063 = vpow.pop %v1062
      %v1064 = vmul.f32 %v963, 1.442695
      %v1065 = vpow.pop %v1064
      %v1066 = vmul.f32 %v964, 1.442695
      %v1067 = vpow.pop %v1066
      %v1068 = vmul.f32 %v965, 1.442695
      %v1069 = vpow.pop %v1068
      %v1070 = vmul.f32 %v966, 1.442695
      %v1071 = vpow.pop %v1070
      %v1072 = vmul.f32 %v967, 1.442695
      %v1073 = vpow.pop %v1072
      %v1074 = vmul.f32 %v968, 1.442695
      %v1075 = vpow.pop %v1074
      %v1076 = vmul.f32 %v969, 1.442695
      %v1077 = vpow.pop %v1076
      %v1078 = vmul.f32 %v970, 1.442695
      %v1079 = vpow.pop %v1078
      %v1080 = vmul.f32 %v971, 1.442695
      %v1081 = vpow.pop %v1080
      %v1082 = vmul.f32 %v972, 1.442695
      %v1083 = vpow.pop %v1082
      %v1084 = vmul.f32 %v973, 1.442695
      %v1085 = vpow.pop %v1084
      %v1086 = vmul.f32 %v974, 1.442695
      %v1087 = vpow.pop %v1086
      %v1088 = vmul.f32 %v975, 1.442695
      %v1089 = vpow.pop %v1088
      %v1090 = vmul.f32 %v976, 1.442695
      %v1091 = vpow.pop %v1090
      %v1092 = vmul.f32 %v977, 1.442695
      %v1093 = vpow.pop %v1092
      %v1094 = vmul.f32 %v978, 1.442695
      %v1095 = vpow.pop %v1094
      %v1096 = vmul.f32 %v979, 1.442695
      %v1097 = vpow.pop %v1096
      %v1098 = vmul.f32 %v980, 1.442695
      %v1099 = vpow.pop %v1098
      %v1100 = vmul.f32 %v981, 1.442695
      %v1101 = vpow.pop %v1100
      %v1102 = vmul.f32 %v982, 1.442695
      %v1103 = vpow.pop %v1102
      %v1104 = vmul.f32 %v983, 1.442695
      %v1105 = vpow.pop %v1104
      %v1106 = vmul.f32 %v984, 1.442695
      %v1107 = vpow.pop %v1106
      %v1108 = vmul.f32 %v985, 1.442695
      %v1109 = vpow.pop %v1108
      %v1110 = vmul.f32 %v986, 1.442695
      %v1111 = vpow.pop %v1110
      %v1112 = vmul.f32 %v987, 1.442695
      %v1113 = vpow.pop %v1112
      %v1114 = vmul.f32 %v988, 1.442695
      %v1115 = vpow.pop %v1114
      %v1116 = vmul.f32 %v989, 1.442695
      %v1117 = vpow.pop %v1116
      %v1118 = vadd.f32 %v991, %v995
      %v1119 = vadd.f32 %v1118, %v999
      %v1120 = vadd.f32 %v1119, %v1003
      %v1121 = vadd.f32 %v1120, %v1007
      %v1122 = vadd.f32 %v1121, %v1011
      %v1123 = vadd.f32 %v1122, %v1015
      %v1124 = vadd.f32 %v1123, %v1019
      %v1125 = vadd.f32 %v1124, %v1023
      %v1126 = vadd.f32 %v1125, %v1027
      %v1127 = vadd.f32 %v1126, %v1031
      %v1128 = vadd.f32 %v1127, %v1035
      %v1129 = vadd.f32 %v1128, %v1039
      %v1130 = vadd.f32 %v1129, %v1043
      %v1131 = vadd.f32 %v1130, %v1047
      %v1132 = vadd.f32 %v1131, %v1051
      %v1133 = vadd.f32 %v1132, %v1055
      %v1134 = vadd.f32 %v1133, %v1059
      %v1135 = vadd.f32 %v1134, %v1063
      %v1136 = vadd.f32 %v1135, %v1067
      %v1137 = vadd.f32 %v1136, %v1071
      %v1138 = vadd.f32 %v1137, %v1075
      %v1139 = vadd.f32 %v1138, %v1079
      %v1140 = vadd.f32 %v1139, %v1083
      %v1141 = vadd.f32 %v1140, %v1087
      %v1142 = vadd.f32 %v1141, %v1091
      %v1143 = vadd.f32 %v1142, %v1095
      %v1144 = vadd.f32 %v1143, %v1099
      %v1145 = vadd.f32 %v1144, %v1103
      %v1146 = vadd.f32 %v1145, %v1107
      %v1147 = vadd.f32 %v1146, %v1111
      %v1148 = vadd.f32 %v1147, %v1115
      %v1149 = vrot.slane %v1148, 4
      %v1150 = vadd.f32 %v1148, %v1149
      %v1151 = vrot.slane %v1150, 2
      %v1152 = vadd.f32 %v1150, %v1151
      %v1153 = vrot.slane %v1152, 1
      %v1154 = vadd.f32 %v1152, %v1153
      %v1155 = vadd.f32 %v993, %v997
      %v1156 = vadd.f32 %v1155, %v1001
      %v1157 = vadd.f32 %v1156, %v1005
      %v1158 = vadd.f32 %v1157, %v1009
      %v1159 = vadd.f32 %v1158, %v1013
      %v1160 = vadd.f32 %v1159, %v1017
      %v1161 = vadd.f32 %v1160, %v1021
      %v1162 = vadd.f32 %v1161, %v1025
      %v1163 = vadd.f32 %v1162, %v1029
      %v1164 = vadd.f32 %v1163, %v1033
      %v1165 = vadd.f32 %v1164, %v1037
      %v1166 = vadd.f32 %v1165, %v1041
      %v1167 = vadd.f32 %v1166, %v1045
      %v1168 = vadd.f32 %v1167, %v1049
      %v1169 = vadd.f32 %v1168, %v1053
      %v1170 = vadd.f32 %v1169, %v1057
      %v1171 = vadd.f32 %v1170, %v1061
      %v1172 = vadd.f32 %v1171, %v1065
      %v1173 = vadd.f32 %v1172, %v1069
      %v1174 = vadd.f32 %v1173, %v1073
      %v1175 = vadd.f32 %v1174, %v1077
      %v1176 = vadd.f32 %v1175, %v1081
      %v1177 = vadd.f32 %v1176, %v1085
      %v1178 = vadd.f32 %v1177, %v1089
      %v1179 = vadd.f32 %v1178, %v1093
      %v1180 = vadd.f32 %v1179, %v1097
      %v1181 = vadd.f32 %v1180, %v1101
      %v1182 = vadd.f32 %v1181, %v1105
      %v1183 = vadd.f32 %v1182, %v1109
      %v1184 = vadd.f32 %v1183, %v1113
      %v1185 = vadd.f32 %v1184, %v1117
      %v1186 = vrot.slane %v1185, 4
      %v1187 = vadd.f32 %v1185, %v1186
      %v1188 = vrot.slane %v1187, 2
      %v1189 = vadd.f32 %v1187, %v1188
      %v1190 = vrot.slane %v1189, 1
      %v1191 = vadd.f32 %v1189, %v1190
      %v1192 = vrcp.pop %v1154
      %v1193 = vmul.f32 %v1154, %v1192
      %v1194 = vsub.f32 1.0, %v1193
      %v1195 = vmul.f32 %v1192, %v1194
      %v1196 = vadd.f32 %v1192, %v1195
      %vm1197 = vweird.f32 %v1154
      %vm1198 = vweird.f32 %v1192
      %vm1199 = vmor %vm1197, %vm1198
      %v1200 = vsel %vm1199, %v1192, %v1196
      %v1201 = vand.u32 2147483647, %v1154
      %vm1202 = vcmp.eq.f32.partialorder %v1201, 8.507059e+37
      %v1203 = vand.u32 %v1154, 2147483648
      %v1204 = vor.u32 1.1754944e-38, %v1203
      %v1205 = vsel %vm1202, %v1204, %v1200
      %v1206 = vrcp.pop %v1191
      %v1207 = vmul.f32 %v1191, %v1206
      %v1208 = vsub.f32 1.0, %v1207
      %v1209 = vmul.f32 %v1206, %v1208
      %v1210 = vadd.f32 %v1206, %v1209
      %vm1211 = vweird.f32 %v1191
      %vm1212 = vweird.f32 %v1206
      %vm1213 = vmor %vm1211, %vm1212
      %v1214 = vsel %vm1213, %v1206, %v1210
      %v1215 = vand.u32 2147483647, %v1191
      %vm1216 = vcmp.eq.f32.partialorder %v1215, 8.507059e+37
      %v1217 = vand.u32 %v1191, 2147483648
      %v1218 = vor.u32 1.1754944e-38, %v1217
      %v1219 = vsel %vm1216, %v1218, %v1214
      %1220 = vmatpush.msra.mxu0 %v1051
      %1221 = vmatpush.msra.mxu0 %v1047
      %1222 = vmatpush.msra.mxu0 %v1043
      %1223 = vmatpush.msra.mxu0 %v1039
      %1224 = vmatpush.msra.mxu0 %v1035
      %1225 = vmatpush.msra.mxu0 %v1031
      %1226 = vmatpush.msra.mxu0 %v1027
      %1227 = vmatpush.msra.mxu0 %v1023
      %1228 = vmatpush.msra.mxu0 %v1019
      %1229 = vmatpush.msra.mxu0 %v1015
      %1230 = vmatpush.msra.mxu0 %v1011
      %1231 = vmatpush.msra.mxu0 %v1007
      %1232 = vmatpush.msra.mxu0 %v1003
      %1233 = vmatpush.msra.mxu0 %v999
      %1234 = vmatpush.msra.mxu0 %v995
      %1235 = vmatpush.msra.mxu0 %v991
      %1236 = vmatmul.f32.gmra.mxu0 %v438
      %v1237 = vpop.f32.mrf.mxu0
      %v1238 = vadd.f32 0.0, %v1237
      %1239 = vdwg.mxu0
      %1240 = vmatpush.msra.mxu0 %v1115
      %1241 = vmatpush.msra.mxu0 %v1111
      %1242 = vmatpush.msra.mxu0 %v1107
      %1243 = vmatpush.msra.mxu0 %v1103
      %1244 = vmatpush.msra.mxu0 %v1099
      %1245 = vmatpush.msra.mxu0 %v1095
      %1246 = vmatpush.msra.mxu0 %v1091
      %1247 = vmatpush.msra.mxu0 %v1087
      %1248 = vmatpush.msra.mxu0 %v1083
      %1249 = vmatpush.msra.mxu0 %v1079
      %1250 = vmatpush.msra.mxu0 %v1075
      %1251 = vmatpush.msra.mxu0 %v1071
      %1252 = vmatpush.msra.mxu0 %v1067
      %1253 = vmatpush.msra.mxu0 %v1063
      %1254 = vmatpush.msra.mxu0 %v1059
      %1255 = vmatpush.msra.mxu0 %v1055
      %1256 = vmatmul.f32.gmra.mxu0 %v461
      %v1257 = vpop.f32.mrf.mxu0
      %v1258 = vadd.f32 %v1238, %v1257
      %1259 = vdwg.mxu0
      %1260 = vmatpush.msra.mxu0 %v1053
      %1261 = vmatpush.msra.mxu0 %v1049
      %1262 = vmatpush.msra.mxu0 %v1045
      %1263 = vmatpush.msra.mxu0 %v1041
      %1264 = vmatpush.msra.mxu0 %v1037
      %1265 = vmatpush.msra.mxu0 %v1033
      %1266 = vmatpush.msra.mxu0 %v1029
      %1267 = vmatpush.msra.mxu0 %v1025
      %1268 = vmatpush.msra.mxu0 %v1021
      %1269 = vmatpush.msra.mxu0 %v1017
      %1270 = vmatpush.msra.mxu0 %v1013
      %1271 = vmatpush.msra.mxu0 %v1009
      %1272 = vmatpush.msra.mxu0 %v1005
      %1273 = vmatpush.msra.mxu0 %v1001
      %1274 = vmatpush.msra.mxu0 %v997
      %1275 = vmatpush.msra.mxu0 %v993
      %1276 = vmatmul.f32.gmra.mxu0 %v438
      %v1277 = vpop.f32.mrf.mxu0
      %v1278 = vadd.f32 0.0, %v1277
      %1279 = vdwg.mxu0
      %1280 = vmatpush.msra.mxu0 %v1117
      %1281 = vmatpush.msra.mxu0 %v1113
      %1282 = vmatpush.msra.mxu0 %v1109
      %1283 = vmatpush.msra.mxu0 %v1105
      %1284 = vmatpush.msra.mxu0 %v1101
      %1285 = vmatpush.msra.mxu0 %v1097
      %1286 = vmatpush.msra.mxu0 %v1093
      %1287 = vmatpush.msra.mxu0 %v1089
      %1288 = vmatpush.msra.mxu0 %v1085
      %1289 = vmatpush.msra.mxu0 %v1081
      %1290 = vmatpush.msra.mxu0 %v1077
      %1291 = vmatpush.msra.mxu0 %v1073
      %1292 = vmatpush.msra.mxu0 %v1069
      %1293 = vmatpush.msra.mxu0 %v1065
      %1294 = vmatpush.msra.mxu0 %v1061
      %1295 = vmatpush.msra.mxu0 %v1057
      %1296 = vmatmul.f32.gmra.mxu0 %v461
      %v1297 = vpop.f32.mrf.mxu0
      %v1298 = vadd.f32 %v1278, %v1297
      %1299 = vdwg.mxu0
      %v1300 = vld [vmem:[%s334] sm:$0x7]
      %v1302 = vsel %vm529, %v1300, 0
      %1304 = vmatpush.msra.mxu0 0.0
      %1305 = vmatpush.msra.mxu0 0.0
      %1306 = vmatpush.msra.mxu0 0.0
      %1307 = vmatpush.msra.mxu0 0.0
      %1308 = vmatpush.msra.mxu0 0.0
      %1309 = vmatpush.msra.mxu0 0.0
      %1310 = vmatpush.msra.mxu0 0.0
      %1311 = vmatpush.msra.mxu0 0.0
      %1312 = vmatpush.msra.mxu0 0.0
      %1313 = vmatpush.msra.mxu0 0.0
      %1314 = vmatpush.msra.mxu0 0.0
      %1315 = vmatpush.msra.mxu0 0.0
      %1316 = vmatpush.msra.mxu0 0.0
      %1317 = vmatpush.msra.mxu0 0.0
      %1318 = vmatpush.msra.mxu0 0.0
      %1319 = vmatpush.msra.mxu0 %v1258
      %1320 = vmatmul.f32.gmra.mxu0 %v1302
      %v1321 = vpop.f32.mrf.mxu0
      %v1322 = vadd.f32 0.0, %v1321
      %1323 = vdwg.mxu0
      %1324 = vmatpush.msra.mxu0 0.0
      %1325 = vmatpush.msra.mxu0 0.0
      %1326 = vmatpush.msra.mxu0 0.0
      %1327 = vmatpush.msra.mxu0 0.0
      %1328 = vmatpush.msra.mxu0 0.0
      %1329 = vmatpush.msra.mxu0 0.0
      %1330 = vmatpush.msra.mxu0 0.0
      %1331 = vmatpush.msra.mxu0 0.0
      %1332 = vmatpush.msra.mxu0 0.0
      %1333 = vmatpush.msra.mxu0 0.0
      %1334 = vmatpush.msra.mxu0 0.0
      %1335 = vmatpush.msra.mxu0 0.0
      %1336 = vmatpush.msra.mxu0 0.0
      %1337 = vmatpush.msra.mxu0 0.0
      %1338 = vmatpush.msra.mxu0 0.0
      %1339 = vmatpush.msra.mxu0 %v1298
      %1340 = vmatmul.f32.gmra.mxu0 %v1302
      %v1341 = vpop.f32.mrf.mxu0
      %v1342 = vadd.f32 0.0, %v1341
      %1343 = vdwg.mxu0
      %v1344 = vmul.f32 %v1322, %v1205
      %v1345 = vmul.f32 %v1342, %v1219
      %p1346 = scmp.eq.s32.totalorder %s23, 0
      // Predicated region
      $region41: #{tpu_custom_call.1} parent=39 // pred_check
        %p1347 = pneg %p1346
      $region42: #{tpu_custom_call.1} parent=39 // pred_check_branch
        %1349 = sbr.rel (%p1347) target = $region44
      $region43: #{tpu_custom_call.1} parent=39 // pred_region
        %1350 = vst [vmem:[#allocation2] sm:$0x77] 0.0
      $region44: #{tpu_custom_call.1} parent=39 // pred_fallthru
        _
      %v1351 = vld [vmem:[#allocation2] sm:$0x77]
      %v1354 = vrot.slane %v1345, 4
      %vm1355 = vcmask 1043456
      %v1356 = vsel %vm1355, %v1344, %v1354
      %v1358 = vadd.f32 %v1351, %v1356
      %1359 = vst [vmem:[#allocation2] sm:$0x77] %v1358
      %p1360 = scmp.eq.s32.totalorder %s23, 3
      // Predicated region
      $region45: #{tpu_custom_call.1} parent=39 // pred_check
        %p1361 = pneg %p1360
      $region46: #{tpu_custom_call.1} parent=39 // pred_check_branch
        %1363 = sbr.rel (%p1361) target = $region48
      $region47: #{tpu_custom_call.1} parent=39 // pred_region
        %v1364 = vld [vmem:[#allocation2] sm:$0x77]
        %1365 = vst [vmem:[%s343] sm:$0x77] %v1364
      $region48: #{tpu_custom_call.1} parent=39 // pred_fallthru
        _
      %s1366 = smul.u32 2, %s22
      %p1367 = scmp.lt.s32.totalorder %s21, 1
      %s1368 = scalar_select %p1367, %s21, 1
      %p1369 = scmp.lt.s32.totalorder %s1366, 1
      %s1370 = scalar_select %p1369, %s1366, 1
      %s1371 = smul.addr %s1368, 2
      %s1372 = sadd.s32 %s1370, %s1371
      %s1373 = smul.addr %s1372, 4
      %s1374 = scalar_lea.vmem %s5, %s1373
      // Predicated region
      $region49: #{tpu_custom_call.1} parent=39 // pred_check
        %p1375 = pneg %p187
      $region50: #{tpu_custom_call.1} parent=39 // pred_check_branch
        %1377 = sbr.rel (%p1375) target = $region52
      $region51: #{tpu_custom_call.1} parent=39 // pred_region
        %s1378 = smul.u32 2, %s22
      $region52: #{tpu_custom_call.1} parent=39 // pred_fallthru
        _
    $region40: #{tpu_custom_call.1} parent=5 // pred_fallthru
      _
    %p1379 = scmp.le.s32.totalorder 2, %s11
    // Predicated region
    $region53: #{tpu_custom_call.1} parent=5 // pred_check
      %p1380 = pneg %p1379
    $region54: #{tpu_custom_call.1} parent=5 // pred_check_branch
      %1382 = sbr.rel (%p1380) target = $region56
    $region55: #{tpu_custom_call.1} parent=5 // pred_region
      %s1383 = ssub.s32 %s11, 2
      // Predicated region
      $region57: #{tpu_custom_call.1} parent=55 // pred_check
        %p1384 = pneg %p193
      $region58: #{tpu_custom_call.1} parent=55 // pred_check_branch
        %1386 = sbr.rel (%p1384) target = $region60
      $region59: #{tpu_custom_call.1} parent=55 // pred_region
        %s1387 = smul.u32 2, %s25
        %p1388 = scmp.lt.s32.totalorder %s24, 1
        %s1389 = scalar_select %p1388, %s24, 1
        %p1390 = scmp.lt.s32.totalorder %s1387, 1
        %s1391 = scalar_select %p1390, %s1387, 1
        %s1392 = smul.addr %s1389, 2
        %s1393 = sadd.s32 %s1391, %s1392
        %s1394 = smul.addr %s1393, 4
        %s1395 = scalar_lea.vmem %s5, %s1394
      $region60: #{tpu_custom_call.1} parent=55 // pred_fallthru
        _
    $region56: #{tpu_custom_call.1} parent=5 // pred_fallthru
      _
  $region6: #{tpu_custom_call.1} parent=0 // loop_footer
    %s15 = sadd.s32 1, %s11
  $region7: #{tpu_custom_call.1} parent=0 // loop_footer_branch
    %10 = sbr.rel target = $region3
  $region8: #{tpu_custom_call.1} parent=0 // loop_exit
    _

</llo_original>
